<compile_context>
chip_gen: v6e
topology: v6e:2x2x1
jax: 0.10.0
libtpu: 0.0.40
codegen_flags: <defaults>
</compile_context>

<pallas_src>
import functools

import jax
import jax.numpy as jnp
from jax import lax
from jax.experimental import pallas as pl
from jax.experimental.pallas import tpu as pltpu

LANE = 128


def _round_up(x, m):
    return (x + m - 1) // m * m


def _batch_tiling(B):
    """Return (tile, padded_batch).

    Small batches: a single grid step, batch padded only to a multiple of 16
    (native bf16 sublane tile).  Large batches: lane-dense 128-multiple tiles,
    >= 2 grid steps (v7x megacore sharding), <= ~12.5% zero padding.
    """
    if B <= 512:
        bp = _round_up(B, 16)
        return bp, bp
    for tb in (1024, 512, 256, 128):
        bp = _round_up(B, tb)
        if bp // tb >= 2 and bp - B <= bp // 8:
            return tb, bp
    bp = _round_up(B, 128)
    return 128, bp


def fused_mlp_kernel(x_ref, w1_ref, w2_ref, wt_ref, bsl_ref, out_ref):
    # x_ref   : (TB, obs_dim)     f32  -- raw input tile (no lane padding)
    # w1_ref  : (obs_dim, 128)    bf16 -- Linear(obs,32) padded to 128 lanes
    # w2_ref  : (128, 128)        bf16 -- Linear(32,64) padded
    # wt_ref  : (nout_pad, 128)   f32  -- collapsed tail weight^T; col 64 = tail bias
    # bsl_ref : (8, 128)          f32  -- row0 b1, row1 b2 (lane 64 = 1.0), row2 a1, row3 a2
    # out_ref : (nout_pad, TB)    f32  -- batch-in-lanes output
    bsl = bsl_ref[...]                       # one (8,128) vld, slice the value
    b1 = bsl[0:1, :]
    b2 = bsl[1:2, :]
    a1 = bsl[2:3, :]
    a2 = bsl[3:4, :]

    x = x_ref[...].astype(jnp.bfloat16)

    # shared[0]: Linear(obs, 32) + PReLU   (zero-padded lanes stay exactly 0)
    h = jnp.dot(x, w1_ref[...], preferred_element_type=jnp.float32) + b1
    h = jnp.where(h >= 0.0, h, h * a1).astype(jnp.bfloat16)

    # shared[2]: Linear(32, 64) + PReLU.  b2 lane 64 == 1.0 makes h[:, 64] == 1.0,
    # which acts as the homogeneous "bias" feature for the tail matmul below.
    h = jnp.dot(h, w2_ref[...], preferred_element_type=jnp.float32) + b2
    h = jnp.where(h >= 0.0, h, h * a2)       # stays f32 for the value head

    # collapsed tail: (nout_pad,128) @ (TB,128)^T -> (nout_pad, TB), f32 on the MXU.
    out_ref[...] = lax.dot_general(
        wt_ref[...], h, (((1,), (1,)), ((), ())),
        preferred_element_type=jnp.float32)


def prepare_packed_params(params, num_outputs):
    """Host-side prep: pad the first two weights to 128 lanes (bf16), collapse
    the three linear tail layers into one transposed f32 weight with its bias
    folded into feature column 64, and pack biases + PReLU alphas into one
    (8, 128) f32 slab."""
    obs_dim = params["w1"].shape[0]
    nout_pad = max(8, _round_up(num_outputs + 1, 8))

    w1 = jnp.zeros((obs_dim, LANE), jnp.float32).at[:, :32].set(params["w1"])
    w1 = w1.astype(jnp.bfloat16)                                             # (obs,128)
    w2 = jnp.zeros((LANE, LANE), jnp.float32).at[:32, :64].set(params["w2"])
    w2 = w2.astype(jnp.bfloat16)                                             # (128,128)

    # Exact f32 collapse: W_tail = w3 @ [wl | wv], b_tail = b3 @ [wl | wv] + [bl | bv]
    w_tail = jnp.concatenate(
        [params["w3"] @ params["wl"], params["w3"] @ params["wv"]], axis=1)  # (64, nout+1)
    b_tail = jnp.concatenate(
        [params["b3"] @ params["wl"] + params["bl"],
         params["b3"] @ params["wv"] + params["bv"]], axis=1)                # (1, nout+1)

    # Transposed tail weight (f32).  Columns 0..63 = features, column 64 = bias
    # (multiplied by the forced h2[:,64] == 1.0 lane), columns 65..127 = 0.
    wt = jnp.zeros((nout_pad, LANE), jnp.float32)
    wt = wt.at[: num_outputs + 1, :64].set(w_tail.T)
    wt = wt.at[: num_outputs + 1, 64].set(b_tail[0])

    bsl = jnp.zeros((8, LANE), jnp.float32)
    bsl = bsl.at[0, :32].set(params["b1"][0])
    bsl = bsl.at[1, :64].set(params["b2"][0])
    bsl = bsl.at[1, 64].set(1.0)              # homogeneous bias lane for the tail
    bsl = bsl.at[2, :].set(params["a1"][0])   # PReLU alpha 1 (scalar, broadcast)
    bsl = bsl.at[3, :].set(params["a2"][0])   # PReLU alpha 2
    return w1, w2, wt, bsl


@functools.partial(jax.jit, static_argnames=("num_outputs",))
def torch_test_model_forward(x, w1, w2, wt, bsl, *, num_outputs):
    """Returns (logits, value_out) exactly like TorchTestModel.forward /
    value_function (RLlib `state` is passed through unchanged by the caller)."""
    B, obs_dim = x.shape
    nout_pad = wt.shape[0]
    TB, B_pad = _batch_tiling(B)

    if B_pad != B:
        # tiny batch-row pad only (64 B/row of real width) -- no lane amplification
        x = jnp.pad(x, ((0, B_pad - B), (0, 0)))

    out_t = pl.pallas_call(
        fused_mlp_kernel,
        out_shape=jax.ShapeDtypeStruct((nout_pad, B_pad), jnp.float32),
        grid=(B_pad // TB,),
        in_specs=[
            pl.BlockSpec((TB, obs_dim), lambda i: (i, 0)),     # x tile, raw f32
            pl.BlockSpec((obs_dim, LANE), lambda i: (0, 0)),   # w1 (resident)
            pl.BlockSpec((LANE, LANE), lambda i: (0, 0)),      # w2 (resident)
            pl.BlockSpec((nout_pad, LANE), lambda i: (0, 0)),  # tail weight^T (resident)
            pl.BlockSpec((8, LANE), lambda i: (0, 0)),         # biases + alphas (resident)
        ],
        out_specs=pl.BlockSpec((nout_pad, TB), lambda i: (0, i)),
        compiler_params=pltpu.CompilerParams(dimension_semantics=("parallel",)),
    )(x, w1, w2, wt, bsl)

    logits = out_t[:num_outputs, :B].T
    value = out_t[num_outputs:num_outputs + 1, :B].T
    return logits, value


def init_params(key, obs_dim, num_outputs):
    """Deterministic synthetic parameters matching the PyTorch module's shapes.
    Linear weights are stored already transposed to (in, out)."""
    ks = jax.random.split(key, 10)

    def lin(kw, kb, fan_in, fan_out):
        bound = 1.0 / jnp.sqrt(fan_in)
        w = jax.random.uniform(kw, (fan_in, fan_out), jnp.float32, -bound, bound)
        b = jax.random.uniform(kb, (1, fan_out), jnp.float32, -bound, bound)
        return w, b

    w1, b1 = lin(ks[0], ks[1], obs_dim, 32)
    w2, b2 = lin(ks[2], ks[3], 32, 64)
    w3, b3 = lin(ks[4], ks[5], 64, 8)
    wl, bl = lin(ks[6], ks[7], 8, num_outputs)
    wv, bv = lin(ks[8], ks[9], 8, 1)

    return {
        "w1": w1, "b1": b1, "a1": jnp.full((1,), 0.25, jnp.float32),  # nn.PReLU() init
        "w2": w2, "b2": b2, "a2": jnp.full((1,), 0.25, jnp.float32),
        "w3": w3, "b3": b3,
        "wl": wl, "bl": bl,
        "wv": wv, "bv": bv,
    }


def reference_forward(x, p):
    """Pure-f32 reference matching the original (un-collapsed) PyTorch graph."""
    def prelu(h, a):
        return jnp.where(h >= 0, h, a * h)
    h = prelu(x @ p["w1"] + p["b1"], p["a1"][0])
    h = prelu(h @ p["w2"] + p["b2"], p["a2"][0])
    feat = h @ p["w3"] + p["b3"]
    return feat @ p["wl"] + p["bl"], feat @ p["wv"] + p["bv"]


if __name__ == "__main__":
    # obs_space.shape = (16,) -> obs_dim = 16 ; num_outputs = 4 ; batch = 8
    B, OBS_DIM, NUM_OUTPUTS = 8, 16, 4

    key = jax.random.PRNGKey(0)
    kx, kp = jax.random.split(key)
    x = jax.random.normal(kx, (B, OBS_DIM), jnp.float32)
    params = init_params(kp, OBS_DIM, NUM_OUTPUTS)

    w1, w2, wt, bsl = prepare_packed_params(params, NUM_OUTPUTS)

    logits, value = torch_test_model_forward(x, w1, w2, wt, bsl,
                                             num_outputs=NUM_OUTPUTS)
    jax.block_until_ready((logits, value))

    ref_logits, ref_value = reference_forward(x, params)
    assert logits.shape == (B, NUM_OUTPUTS) and value.shape == (B, 1)
    # bf16 first two layers (f32 accumulation + f32 tail) vs the pure-f32 reference.
    assert jnp.allclose(logits, ref_logits, atol=3e-2, rtol=3e-2)
    assert jnp.allclose(value, ref_value, atol=3e-2, rtol=3e-2)

    print("KERNEL_OK")
</pallas_src>

<mosaic_0001>
module attributes {stable_mosaic.version = 11 : i64} {
  func.func @fused_mlp_kernel(%arg0: i32, %arg1: memref<16x16xf32, #tpu.memory_space<vmem>>, %arg2: memref<16x128xbf16, #tpu.memory_space<vmem>>, %arg3: memref<128x128xbf16, #tpu.memory_space<vmem>>, %arg4: memref<8x128xf32, #tpu.memory_space<vmem>>, %arg5: memref<8x128xf32, #tpu.memory_space<vmem>>, %arg6: memref<8x16xf32, #tpu.memory_space<vmem>>) attributes {dimension_semantics = [#tpu.dimension_semantics<parallel>], iteration_bounds = array<i64: 1>, scalar_prefetch = 0 : i64, scratch_operands = 0 : i64, tpu.core_type = #tpu.core_type<tc>, window_params = [{transform_indices = @transform_0, window_bounds = array<i64: 16, 16>}, {pipeline_mode = #tpu.pipeline_mode<synchronous>, transform_indices = @transform_1, window_bounds = array<i64: 16, 128>}, {pipeline_mode = #tpu.pipeline_mode<synchronous>, transform_indices = @transform_2, window_bounds = array<i64: 128, 128>}, {pipeline_mode = #tpu.pipeline_mode<synchronous>, transform_indices = @transform_3, window_bounds = array<i64: 8, 128>}, {pipeline_mode = #tpu.pipeline_mode<synchronous>, transform_indices = @transform_4, window_bounds = array<i64: 8, 128>}, {transform_indices = @transform_5, window_bounds = array<i64: 8, 16>}]} {
    %c0 = arith.constant 0 : index
    %c0_0 = arith.constant 0 : index
    %0 = vector.load %arg5[%c0, %c0_0] : memref<8x128xf32, #tpu.memory_space<vmem>>, vector<8x128xf32>
    %1 = vector.extract_strided_slice %0 {offsets = [0, 0], sizes = [1, 128], strides = [1, 1]} : vector<8x128xf32> to vector<1x128xf32>
    %2 = vector.extract_strided_slice %0 {offsets = [1, 0], sizes = [1, 128], strides = [1, 1]} : vector<8x128xf32> to vector<1x128xf32>
    %3 = vector.extract_strided_slice %0 {offsets = [2, 0], sizes = [1, 128], strides = [1, 1]} : vector<8x128xf32> to vector<1x128xf32>
    %4 = vector.extract_strided_slice %0 {offsets = [3, 0], sizes = [1, 128], strides = [1, 1]} : vector<8x128xf32> to vector<1x128xf32>
    %c0_1 = arith.constant 0 : index
    %c0_2 = arith.constant 0 : index
    %5 = vector.load %arg1[%c0_1, %c0_2] : memref<16x16xf32, #tpu.memory_space<vmem>>, vector<16x16xf32>
    %6 = arith.truncf %5 : vector<16x16xf32> to vector<16x16xbf16>
    %c0_3 = arith.constant 0 : index
    %c0_4 = arith.constant 0 : index
    %7 = vector.load %arg2[%c0_3, %c0_4] : memref<16x128xbf16, #tpu.memory_space<vmem>>, vector<16x128xbf16>
    %cst = arith.constant dense<0.000000e+00> : vector<16x128xf32>
    %8 = tpu.matmul %6, %7, %cst {dimension_numbers = #tpu.dot_dimension_numbers<[1], [0], [0], [1], [0, 0, 1, 1], [], []>} : vector<16x16xbf16>, vector<16x128xbf16>, vector<16x128xf32> -> vector<16x128xf32>
    %9 = vector.broadcast %1 : vector<1x128xf32> to vector<16x128xf32>
    %10 = arith.addf %8, %9 : vector<16x128xf32>
    %cst_5 = arith.constant 0.000000e+00 : f32
    %11 = vector.broadcast %cst_5 : f32 to vector<16x128xf32>
    %12 = arith.cmpf oge, %10, %11 : vector<16x128xf32>
    %13 = vector.broadcast %3 : vector<1x128xf32> to vector<16x128xf32>
    %14 = arith.mulf %10, %13 : vector<16x128xf32>
    %15 = arith.select %12, %10, %14 : vector<16x128xi1>, vector<16x128xf32>
    %16 = arith.truncf %15 : vector<16x128xf32> to vector<16x128xbf16>
    %c0_6 = arith.constant 0 : index
    %c0_7 = arith.constant 0 : index
    %17 = vector.load %arg3[%c0_6, %c0_7] : memref<128x128xbf16, #tpu.memory_space<vmem>>, vector<128x128xbf16>
    %cst_8 = arith.constant dense<0.000000e+00> : vector<16x128xf32>
    %18 = tpu.matmul %16, %17, %cst_8 {dimension_numbers = #tpu.dot_dimension_numbers<[1], [0], [0], [1], [0, 0, 1, 1], [], []>} : vector<16x128xbf16>, vector<128x128xbf16>, vector<16x128xf32> -> vector<16x128xf32>
    %19 = vector.broadcast %2 : vector<1x128xf32> to vector<16x128xf32>
    %20 = arith.addf %18, %19 : vector<16x128xf32>
    %cst_9 = arith.constant 0.000000e+00 : f32
    %21 = vector.broadcast %cst_9 : f32 to vector<16x128xf32>
    %22 = arith.cmpf oge, %20, %21 : vector<16x128xf32>
    %23 = vector.broadcast %4 : vector<1x128xf32> to vector<16x128xf32>
    %24 = arith.mulf %20, %23 : vector<16x128xf32>
    %25 = arith.select %22, %20, %24 : vector<16x128xi1>, vector<16x128xf32>
    %c0_10 = arith.constant 0 : index
    %c0_11 = arith.constant 0 : index
    %26 = vector.load %arg4[%c0_10, %c0_11] : memref<8x128xf32, #tpu.memory_space<vmem>>, vector<8x128xf32>
    %cst_12 = arith.constant dense<0.000000e+00> : vector<8x16xf32>
    %27 = tpu.matmul %26, %25, %cst_12 {dimension_numbers = #tpu.dot_dimension_numbers<[1], [1], [0], [0], [0, 0, 1, 0], [], []>} : vector<8x128xf32>, vector<16x128xf32>, vector<8x16xf32> -> vector<8x16xf32>
    %c0_13 = arith.constant 0 : index
    %c0_14 = arith.constant 0 : index
    %28 = vector.load %arg6[%c0_13, %c0_14] : memref<8x16xf32, #tpu.memory_space<vmem>>, vector<8x16xf32>
    tpu.vector_store %arg6[%c0_13, %c0_14], %27 {strides = array<i32>} : memref<8x16xf32, #tpu.memory_space<vmem>>, vector<8x16xf32>,
    return
  }
  func.func @transform_0(%arg0: i32) -> (i32, i32) {
    %c0_i32 = arith.constant 0 : i32
    %c0_i32_0 = arith.constant 0 : i32
    return %arg0, %c0_i32 : i32, i32
  }
  func.func @transform_1(%arg0: i32) -> (i32, i32) {
    %c0_i32 = arith.constant 0 : i32
    %c0_i32_0 = arith.constant 0 : i32
    %c0_i32_1 = arith.constant 0 : i32
    return %c0_i32, %c0_i32_0 : i32, i32
  }
  func.func @transform_2(%arg0: i32) -> (i32, i32) {
    %c0_i32 = arith.constant 0 : i32
    %c0_i32_0 = arith.constant 0 : i32
    %c0_i32_1 = arith.constant 0 : i32
    return %c0_i32, %c0_i32_0 : i32, i32
  }
  func.func @transform_3(%arg0: i32) -> (i32, i32) {
    %c0_i32 = arith.constant 0 : i32
    %c0_i32_0 = arith.constant 0 : i32
    %c0_i32_1 = arith.constant 0 : i32
    return %c0_i32, %c0_i32_0 : i32, i32
  }
  func.func @transform_4(%arg0: i32) -> (i32, i32) {
    %c0_i32 = arith.constant 0 : i32
    %c0_i32_0 = arith.constant 0 : i32
    %c0_i32_1 = arith.constant 0 : i32
    return %c0_i32, %c0_i32_0 : i32, i32
  }
  func.func @transform_5(%arg0: i32) -> (i32, i32) {
    %c0_i32 = arith.constant 0 : i32
    %c0_i32_0 = arith.constant 0 : i32
    return %c0_i32, %arg0 : i32, i32
  }
}

</mosaic_0001>

<llo_original>
// kernel: torch_test_model_forward.1
$region0: #{torch_test_model_forward.1}
  #allocation0 [shape = 'u32[]', space=smem, size = 0x4, offset = 0x4, fixed_abs, tag = 'smem constant byte address 0x4 - core index']
  #allocation1 [shape = 'u32[144,128]{1,0:T(1,128)}', space=vmem, size = 0x12000, scoped, tag = 'internal scratch']
  %s0 = inlined_call_operand.vmem [shape: f32[16,16], index: 0, kind: input, shape index: {}]
  %s1 = inlined_call_operand.vmem [shape: bf16[16,128], index: 1, kind: input, shape index: {}]
  %s2 = inlined_call_operand.hbm [shape: bf16[128,128], index: 2, kind: input, shape index: {}]
  %s3 = inlined_call_operand.vmem [shape: f32[8,128], index: 3, kind: input, shape index: {}]
  %s4 = inlined_call_operand.vmem [shape: f32[8,128], index: 4, kind: input, shape index: {}]
  %s5 = inlined_call_operand.vmem [shape: f32[8,16], index: 5, kind: output, shape index: {}]
  %s6 = sld [smem:[#allocation0]]
  $region34: #{torch_test_model_forward.1} parent=0
    _
  %s8 = ssub.s32 1, %s6
  %s9 = scalar_select 0, %s8, %s6
  $region1: #{torch_test_model_forward.1} parent=0
    #allocation2 [shape = 'u8[32768]{0}', space=vmem, size = 0x8000, scoped, tag = 'input window, operand 2, single buffered']
    #allocation3 [shape = 's32[1]{0}', space=sflag, size = 0x4, scoped, tag = 'scoped memory for torch_test_model_forward.1']
    %10 = vsyncpa [#allocation3], 0
    // Predicated region
    $region2: #{torch_test_model_forward.1} parent=1 // pred_check
      _
    $region3: #{torch_test_model_forward.1} parent=1 // pred_check_branch
      %12 = sbr.rel (0) target = $region5
    $region4: #{torch_test_model_forward.1} parent=1 // pred_region
      _
    $region5: #{torch_test_model_forward.1} parent=1 // pred_fallthru
      _
    // Predicated region
    $region6: #{torch_test_model_forward.1} parent=1 // pred_check
      _
    $region7: #{torch_test_model_forward.1} parent=1 // pred_check_branch
      %14 = sbr.rel (0) target = $region9
    $region8: #{torch_test_model_forward.1} parent=1 // pred_region
      _
    $region9: #{torch_test_model_forward.1} parent=1 // pred_fallthru
      _
    // Predicated region
    $region10: #{torch_test_model_forward.1} parent=1 // pred_check
      _
    $region11: #{torch_test_model_forward.1} parent=1 // pred_check_branch
      %16 = sbr.rel (0) target = $region13
    $region12: #{torch_test_model_forward.1} parent=1 // pred_region
      %s18 = ssub.s32 1024, 1024
      %19 = vsyncadd [#allocation3], %s18
      %s20 = sshll.u32 [#allocation2], 4
      %s21 = int_to_ptr.vmem [resolvable:$true] %s20
      %26 = dma.hbm_to_vmem [thread:$0]  %s2, 1024, %s21, [#allocation3], 64, 64, 4
    $region13: #{torch_test_model_forward.1} parent=1 // pred_fallthru
      _
    // Predicated region
    $region14: #{torch_test_model_forward.1} parent=1 // pred_check
      _
    $region15: #{torch_test_model_forward.1} parent=1 // pred_check_branch
      %28 = sbr.rel (0) target = $region17
    $region16: #{torch_test_model_forward.1} parent=1 // pred_region
      _
    $region17: #{torch_test_model_forward.1} parent=1 // pred_fallthru
      _
    // Predicated region
    $region18: #{torch_test_model_forward.1} parent=1 // pred_check
      _
    $region19: #{torch_test_model_forward.1} parent=1 // pred_check_branch
      %30 = sbr.rel (0) target = $region21
    $region20: #{torch_test_model_forward.1} parent=1 // pred_region
      _
    $region21: #{torch_test_model_forward.1} parent=1 // pred_fallthru
      _
    // Predicated region
    $region22: #{torch_test_model_forward.1} parent=1 // pred_check
      _
    $region23: #{torch_test_model_forward.1} parent=1 // pred_check_branch
      %32 = sbr.rel (0) target = $region25
    $region24: #{torch_test_model_forward.1} parent=1 // pred_region
      %33 = dma.done [#allocation3], 1024
    $region25: #{torch_test_model_forward.1} parent=1 // pred_fallthru
      _
    %v35 = vld [vmem:[%s4] sm:$0xff]
    %v36 = vld [vmem:[%s0] sm:$0xff]
    %v37 = vld [vmem:[%s0 + $0x8] sm:$0xff]
    %v38 = vpack.c.bf16 %v37, %v36
    %v39 = vld [vmem:[%s1] sm:$0xf]
    %v40 = vld [vmem:[%s1 + $0x4] sm:$0xf]
    %v41 = vlaneseq
    %v42 = vshrl.u32 %v41, 7
    %v43 = vsub.s32 0, %v42
    %v44 = vrot.slane %v35, %v43
    %v47 = vunpack.c.l.b16 %v39
    %v48 = vunpack.c.l.b16 %v40
    %v49 = vpack.c.b16 %v48, %v47
    %vm51 = vcmask 130048
    %v53 = vsel %vm51, %v38, 0
    %55 = vmatprep.subr.bf16.mxu0 0
    %56 = vmatpush1.bf16.msra.mxu0 0
    %57 = vmatprep.subr.bf16.mxu0 0
    %58 = vmatpush1.bf16.msra.mxu0 0
    %59 = vmatprep.subr.bf16.mxu0 0
    %60 = vmatpush1.bf16.msra.mxu0 0
    %61 = vmatprep.subr.bf16.mxu0 0
    %62 = vmatpush1.bf16.msra.mxu0 0
    %63 = vmatprep.subr.bf16.mxu0 0
    %64 = vmatpush1.bf16.msra.mxu0 0
    %65 = vmatprep.subr.bf16.mxu0 0
    %66 = vmatpush1.bf16.msra.mxu0 0
    %67 = vmatprep.subr.bf16.mxu0 0
    %68 = vmatpush1.bf16.msra.mxu0 0
    %69 = vmatprep.subr.bf16.mxu0 0
    %70 = vmatpush1.bf16.msra.mxu0 %v49
    %71 = vmatprep.subr.bf16.mxu0 0
    %72 = vmatpush2.bf16.msra.mxu0 0
    %73 = vmatprep.subr.bf16.mxu0 0
    %74 = vmatpush2.bf16.msra.mxu0 0
    %75 = vmatprep.subr.bf16.mxu0 0
    %76 = vmatpush2.bf16.msra.mxu0 0
    %77 = vmatprep.subr.bf16.mxu0 0
    %78 = vmatpush2.bf16.msra.mxu0 0
    %79 = vmatprep.subr.bf16.mxu0 0
    %80 = vmatpush2.bf16.msra.mxu0 0
    %81 = vmatprep.subr.bf16.mxu0 0
    %82 = vmatpush2.bf16.msra.mxu0 0
    %83 = vmatprep.subr.bf16.mxu0 0
    %84 = vmatpush2.bf16.msra.mxu0 0
    %85 = vmatprep.subr.bf16.mxu0 0
    %86 = vmatpush2.bf16.msra.mxu0 0
    %87 = vmatprep.mubr.bf16.mxu0 0
    %88 = vmatmul.mubr.bf16.gmra.mxu0 %v53
    %v89 = vpop.f32.mrf.mxu0
    %v90 = vadd.f32 %v44, %v89
    %v91 = vpop.f32.mrf.mxu0
    %v92 = vpop.f32.mrf.mxu0
    %v93 = vadd.f32 %v44, %v92
    %v94 = vpop.f32.mrf.mxu0
    %95 = vdwg.mxu0
    %vm96 = vcmp.ge.f32.partialorder %v90, 0.0
    %vm97 = vcmp.ge.f32.partialorder %v93, 0.0
    %v98 = vlaneseq
    %v99 = vshrl.u32 %v98, 7
    %v100 = vsub.s32 2, %v99
    %v101 = vrot.slane %v35, %v100
    %v102 = vmul.f32 %v90, %v101
    %v103 = vmul.f32 %v93, %v101
    %v104 = vsel %vm96, %v90, %v102
    %v105 = vsel %vm97, %v93, %v103
    %v106 = vpack.c.bf16 %v105, %v104
    %v107 = vld [vmem:[#allocation2] sm:$0xf]
    %v108 = vld [vmem:[#allocation2 + $0x4] sm:$0xf]
    %v109 = vld [vmem:[#allocation2 + $0x8] sm:$0xf]
    %v110 = vld [vmem:[#allocation2 + $0xc] sm:$0xf]
    %v111 = vld [vmem:[#allocation2 + $0x10] sm:$0xf]
    %v112 = vld [vmem:[#allocation2 + $0x14] sm:$0xf]
    %v113 = vld [vmem:[#allocation2 + $0x18] sm:$0xf]
    %v114 = vld [vmem:[#allocation2 + $0x1c] sm:$0xf]
    %v115 = vld [vmem:[#allocation2 + $0x20] sm:$0xf]
    %v116 = vld [vmem:[#allocation2 + $0x24] sm:$0xf]
    %v117 = vld [vmem:[#allocation2 + $0x28] sm:$0xf]
    %v118 = vld [vmem:[#allocation2 + $0x2c] sm:$0xf]
    %v119 = vld [vmem:[#allocation2 + $0x30] sm:$0xf]
    %v120 = vld [vmem:[#allocation2 + $0x34] sm:$0xf]
    %v121 = vld [vmem:[#allocation2 + $0x38] sm:$0xf]
    %v122 = vld [vmem:[#allocation2 + $0x3c] sm:$0xf]
    %v123 = vlaneseq
    %v124 = vshrl.u32 %v123, 7
    %v125 = vsub.s32 1, %v124
    %v126 = vrot.slane %v35, %v125
    %v143 = vunpack.c.l.b16 %v107
    %v144 = vunpack.c.l.b16 %v108
    %v145 = vunpack.c.l.b16 %v109
    %v146 = vunpack.c.l.b16 %v110
    %v147 = vunpack.c.l.b16 %v111
    %v148 = vunpack.c.l.b16 %v112
    %v149 = vunpack.c.l.b16 %v113
    %v150 = vunpack.c.l.b16 %v114
    %v151 = vunpack.c.l.b16 %v115
    %v152 = vunpack.c.l.b16 %v116
    %v153 = vunpack.c.l.b16 %v117
    %v154 = vunpack.c.l.b16 %v118
    %v155 = vunpack.c.l.b16 %v119
    %v156 = vunpack.c.l.b16 %v120
    %v157 = vunpack.c.l.b16 %v121
    %v158 = vunpack.c.l.b16 %v122
    %v159 = vpack.c.b16 %v144, %v143
    %v160 = vpack.c.b16 %v146, %v145
    %v161 = vpack.c.b16 %v148, %v147
    %v162 = vpack.c.b16 %v150, %v149
    %v163 = vpack.c.b16 %v152, %v151
    %v164 = vpack.c.b16 %v154, %v153
    %v165 = vpack.c.b16 %v156, %v155
    %v166 = vpack.c.b16 %v158, %v157
    %175 = vmatprep.subr.bf16.mxu0 0
    %176 = vmatpush1.bf16.msra.mxu0 %v166
    %177 = vmatprep.subr.bf16.mxu0 0
    %178 = vmatpush1.bf16.msra.mxu0 %v165
    %179 = vmatprep.subr.bf16.mxu0 0
    %180 = vmatpush1.bf16.msra.mxu0 %v164
    %181 = vmatprep.subr.bf16.mxu0 0
    %182 = vmatpush1.bf16.msra.mxu0 %v163
    %183 = vmatprep.subr.bf16.mxu0 0
    %184 = vmatpush1.bf16.msra.mxu0 %v162
    %185 = vmatprep.subr.bf16.mxu0 0
    %186 = vmatpush1.bf16.msra.mxu0 %v161
    %187 = vmatprep.subr.bf16.mxu0 0
    %188 = vmatpush1.bf16.msra.mxu0 %v160
    %189 = vmatprep.subr.bf16.mxu0 0
    %190 = vmatpush1.bf16.msra.mxu0 %v159
    %191 = vmatprep.subr.bf16.mxu0 0
    %192 = vmatpush2.bf16.msra.mxu0 0
    %193 = vmatprep.subr.bf16.mxu0 0
    %194 = vmatpush2.bf16.msra.mxu0 0
    %195 = vmatprep.subr.bf16.mxu0 0
    %196 = vmatpush2.bf16.msra.mxu0 0
    %197 = vmatprep.subr.bf16.mxu0 0
    %198 = vmatpush2.bf16.msra.mxu0 0
    %199 = vmatprep.subr.bf16.mxu0 0
    %200 = vmatpush2.bf16.msra.mxu0 0
    %201 = vmatprep.subr.bf16.mxu0 0
    %202 = vmatpush2.bf16.msra.mxu0 0
    %203 = vmatprep.subr.bf16.mxu0 0
    %204 = vmatpush2.bf16.msra.mxu0 0
    %205 = vmatprep.subr.bf16.mxu0 0
    %206 = vmatpush2.bf16.msra.mxu0 0
    %207 = vmatprep.mubr.bf16.mxu0 0
    %208 = vmatmul.mubr.bf16.gmra.mxu0 %v106
    %v209 = vpop.f32.mrf.mxu0
    %v210 = vadd.f32 %v126, %v209
    %v211 = vpop.f32.mrf.mxu0
    %v212 = vpop.f32.mrf.mxu0
    %v213 = vadd.f32 %v126, %v212
    %v214 = vpop.f32.mrf.mxu0
    %215 = vdwg.mxu0
    %vm216 = vcmp.ge.f32.partialorder %v210, 0.0
    %vm217 = vcmp.ge.f32.partialorder %v213, 0.0
    %v218 = vlaneseq
    %v219 = vshrl.u32 %v218, 7
    %v220 = vsub.s32 3, %v219
    %v221 = vrot.slane %v35, %v220
    %v222 = vmul.f32 %v210, %v221
    %v223 = vmul.f32 %v213, %v221
    %v224 = vsel %vm216, %v210, %v222
    %v225 = vsel %vm217, %v213, %v223
    %v226 = vld [vmem:[%s3] sm:$0xff]
    %227 = vmatprep.subr.mxu0 0.0
    %228 = vmatpush1.xpose.msra.mxu0 0.0
    %229 = vmatprep.subr.mxu0 0.0
    %230 = vmatpush1.xpose.msra.mxu0 0.0
    %231 = vmatprep.subr.mxu0 0.0
    %232 = vmatpush1.xpose.msra.mxu0 0.0
    %233 = vmatprep.subr.mxu0 0.0
    %234 = vmatpush1.xpose.msra.mxu0 0.0
    %235 = vmatprep.subr.mxu0 0.0
    %236 = vmatpush1.xpose.msra.mxu0 0.0
    %237 = vmatprep.subr.mxu0 0.0
    %238 = vmatpush1.xpose.msra.mxu0 0.0
    %239 = vmatprep.subr.mxu0 0.0
    %240 = vmatpush1.xpose.msra.mxu0 0.0
    %241 = vmatprep.subr.mxu0 0.0
    %242 = vmatpush1.xpose.msra.mxu0 0.0
    %243 = vmatprep.subr.mxu0 0.0
    %244 = vmatpush1.xpose.msra.mxu0 0.0
    %245 = vmatprep.subr.mxu0 0.0
    %246 = vmatpush1.xpose.msra.mxu0 0.0
    %247 = vmatprep.subr.mxu0 0.0
    %248 = vmatpush1.xpose.msra.mxu0 0.0
    %249 = vmatprep.subr.mxu0 0.0
    %250 = vmatpush1.xpose.msra.mxu0 0.0
    %251 = vmatprep.subr.mxu0 0.0
    %252 = vmatpush1.xpose.msra.mxu0 0.0
    %253 = vmatprep.subr.mxu0 0.0
    %254 = vmatpush1.xpose.msra.mxu0 0.0
    %255 = vmatprep.subr.mxu0 0.0
    %256 = vmatpush1.xpose.msra.mxu0 %v225
    %257 = vmatprep.subr.mxu0 0.0
    %258 = vmatpush1.xpose.msra.mxu0 %v224
    %259 = vmatprep.subr.mxu0 0.0
    %260 = vmatpush2.xpose.msra.mxu0 0.0
    %261 = vmatprep.subr.mxu0 0.0
    %262 = vmatpush2.xpose.msra.mxu0 0.0
    %263 = vmatprep.subr.mxu0 0.0
    %264 = vmatpush2.xpose.msra.mxu0 0.0
    %265 = vmatprep.subr.mxu0 0.0
    %266 = vmatpush2.xpose.msra.mxu0 0.0
    %267 = vmatprep.subr.mxu0 0.0
    %268 = vmatpush2.xpose.msra.mxu0 0.0
    %269 = vmatprep.subr.mxu0 0.0
    %270 = vmatpush2.xpose.msra.mxu0 0.0
    %271 = vmatprep.subr.mxu0 0.0
    %272 = vmatpush2.xpose.msra.mxu0 0.0
    %273 = vmatprep.subr.mxu0 0.0
    %274 = vmatpush2.xpose.msra.mxu0 0.0
    %275 = vmatprep.subr.mxu0 0.0
    %276 = vmatpush2.xpose.msra.mxu0 0.0
    %277 = vmatprep.subr.mxu0 0.0
    %278 = vmatpush2.xpose.msra.mxu0 0.0
    %279 = vmatprep.subr.mxu0 0.0
    %280 = vmatpush2.xpose.msra.mxu0 0.0
    %281 = vmatprep.subr.mxu0 0.0
    %282 = vmatpush2.xpose.msra.mxu0 0.0
    %283 = vmatprep.subr.mxu0 0.0
    %284 = vmatpush2.xpose.msra.mxu0 0.0
    %285 = vmatprep.subr.mxu0 0.0
    %286 = vmatpush2.xpose.msra.mxu0 0.0
    %287 = vmatprep.subr.mxu0 0.0
    %288 = vmatpush2.xpose.msra.mxu0 0.0
    %289 = vmatprep.subr.mxu0 0.0
    %290 = vmatpush2.xpose.msra.mxu0 0.0
    %291 = vmatprep.mubr.f32.mxu0 0.0
    %292 = vmatmul.mubr.f32.gmra.mxu0 %v226
    %v293 = vpop.f32.mrf.mxu0
    %v294 = vadd.f32 0.0, %v293
    %v295 = vpop.f32.mrf.mxu0
    %296 = vdwg.mxu0
    %297 = vst.msk [vmem:[%s5] sm:$0xff] %vm51, %v294
    // Predicated region
    $region26: #{torch_test_model_forward.1} parent=1 // pred_check
      _
    $region27: #{torch_test_model_forward.1} parent=1 // pred_check_branch
      %299 = sbr.rel (0) target = $region29
    $region28: #{torch_test_model_forward.1} parent=1 // pred_region
      _
    $region29: #{torch_test_model_forward.1} parent=1 // pred_fallthru
      _
    // Predicated region
    $region30: #{torch_test_model_forward.1} parent=1 // pred_check
      _
    $region31: #{torch_test_model_forward.1} parent=1 // pred_check_branch
      %301 = sbr.rel (0) target = $region33
    $region32: #{torch_test_model_forward.1} parent=1 // pred_region
      _
    $region33: #{torch_test_model_forward.1} parent=1 // pred_fallthru
      _
    %302 = vsyncpa [#allocation3], 1

</llo_original>
